<compile_context>
chip_gen: v7x
topology: tpu7x:2x2x1
jax: 0.10.0
libtpu: 0.0.40
codegen_flags: <defaults>
</compile_context>

<pallas_src>
import jax
import jax.numpy as jnp
from jax import lax
from jax.experimental import pallas as pl
from jax.experimental.pallas import tpu as pltpu


def _round_up(a, b):
    return (a + b - 1) // b * b


# ----------------------------- Pallas kernels ------------------------------


def _matmul_stats_kernel(w_ref, p_ref, y_ref, sum_ref, sq_ref):
    # One M-tile: (4*Cout, 9*Cin) @ (9*Cin, tm) on the MXU with f32 accumulation,
    # lane-dense output tile, plus per-(phase, channel) partial sum / sum-of-squares
    # (f32, reduced before the bf16 downcast of y) for train-mode BatchNorm.
    y = jnp.dot(w_ref[...], p_ref[...], preferred_element_type=jnp.float32)
    y_ref[...] = y.astype(y_ref.dtype)
    # Rows (phase*Cout + c) stay on sublanes; the lane reduction runs on the XLU.
    sum_ref[0] = jnp.sum(y, axis=1, keepdims=True)       # (4*Cout, 1)
    sq_ref[0] = jnp.sum(y * y, axis=1, keepdims=True)    # (4*Cout, 1)


def _bn_relu_kernel(y_ref, scale_ref, shift_ref, o_ref):
    # Streaming normalize + affine + ReLU over one (4*Cout, tm2) tile.
    y = y_ref[...].astype(jnp.float32)
    out = y * scale_ref[...] + shift_ref[...]             # (4*Cout, 1) broadcast
    o_ref[...] = jnp.maximum(out, 0.0).astype(o_ref.dtype)


# ------------------------------ host glue -----------------------------------


def _stacked_weights(weight):
    """ConvTranspose2d weight (Cin, Cout, 4, 4) -> stacked LHS (4*Cout, 9*Cin).

    Output phase (py, px) (= oy%2, ox%2) at pre-upsample position (r, c) reads
    x_pad[r + oy, c + ox] over the shared 3x3 neighbourhood (oy, ox in 0..2) and
    multiplies kernel tap (3 + py - 2*oy, 3 + px - 2*ox) when 0 <= oy-py <= 1 and
    0 <= ox-px <= 1 (zero otherwise)."""
    c_in, c_out = weight.shape[0], weight.shape[1]
    zero = jnp.zeros((c_in, c_out), weight.dtype)
    rows = []
    for py in range(2):
        for px in range(2):
            taps = []
            for oy in range(3):
                for ox in range(3):
                    if 0 <= oy - py <= 1 and 0 <= ox - px <= 1:
                        taps.append(weight[:, :, 3 + py - 2 * oy, 3 + px - 2 * ox])
                    else:
                        taps.append(zero)
            w_p = jnp.stack(taps, axis=-1)                       # (Cin, Cout, 9)
            rows.append(jnp.transpose(w_p, (1, 0, 2)).reshape(c_out, c_in * 9))
    return jnp.concatenate(rows, axis=0)                         # (4*Cout, 9*Cin)


def _patches9(x, dtype):
    """NCHW input -> shared 3x3 patch slab (9*Cin, N*H*W); K on sublanes, M on lanes."""
    # TODO(synk): gather the 3x3 neighbourhood in-kernel from a single padded copy of x
    # (manual DMA / pl.Element windows) to delete this 9x relayout slab entirely.
    n, c_in, h, w = x.shape
    xp = jnp.pad(x, ((0, 0), (0, 0), (1, 1), (1, 1)))
    views = [xp[:, :, oy:oy + h, ox:ox + w] for oy in range(3) for ox in range(3)]
    v = jnp.stack(views, axis=2)                                 # (N, Cin, 9, H, W)
    v = jnp.transpose(v, (1, 2, 0, 3, 4))                        # (Cin, 9, N, H, W)
    return v.reshape(c_in * 9, n * h * w).astype(dtype)


def _vmem_budget():
    """Per-generation (tile budget bytes, vmem_limit_bytes)."""
    cap = 64 * 1024 * 1024            # conservative default (v7x: 64 MiB / TensorCore)
    try:
        cap = int(pltpu.get_tpu_info().vmem_capacity_bytes)
    except Exception:
        pass
    if cap >= 100 * 1024 * 1024:      # v5e / v6e: 128 MiB physical VMEM
        return 40 * 1024 * 1024, 80 * 1024 * 1024
    # v7x (64 MiB per TC, grid axis is megacore-parallel) or unknown: stay modest.
    return 20 * 1024 * 1024, 44 * 1024 * 1024


def _pick_tiles(m_real, k9, co4, in_itemsize, y_itemsize, budget_bytes):
    # Pass 1 VMEM: fixed weight block (x2 buffers) + stats, plus per-column cost of a
    # triple-buffered patch slab and a double-buffered y output tile.
    fixed = 2 * co4 * k9 * in_itemsize + 4 * 2 * co4 * 4
    per_col = 3 * k9 * in_itemsize + 2 * co4 * y_itemsize
    avail = max(budget_bytes - fixed, 0)
    tm_cap = max(128, min(16384, (avail // per_col) // 128 * 128))
    n_m = -(-m_real // tm_cap)                      # cdiv
    tm = _round_up(-(-m_real // n_m), 128)          # balanced: pad waste < 128 * n_m
    m_pad = n_m * tm

    # Pass 2 only streams ~6 bytes/row per column -> allow much wider tiles.
    per_col2 = 3 * co4 * y_itemsize + 2 * co4 * 4
    tm2_cap = max(tm, min(32768, (budget_bytes // per_col2) // 128 * 128))
    k = 1
    for cand in range(min(n_m, tm2_cap // tm), 0, -1):
        if n_m % cand == 0:
            k = cand
            break
    return tm, n_m, m_pad, tm * k, n_m // k


def conv_transpose2d_block(x, weight, gamma, beta, *, stride=2, padding=1, eps=1e-5,
                           compute_dtype=jnp.bfloat16):
    """x: (N, Cin, H, W); weight: (Cin, Cout, k, k) (PyTorch ConvTranspose2d layout)."""
    n, c_in, h, w = x.shape
    c_in_w, c_out, k, k2 = weight.shape
    assert c_in_w == c_in and k == k2
    # Polyphase lowering below is specialised to the DCGAN block defaults.
    assert k == 4 and stride == 2 and padding == 1, "specialised to k=4, s=2, p=1"

    k9 = 9 * c_in
    co4 = 4 * c_out
    m_real = n * h * w

    budget, vmem_limit = _vmem_budget()
    in_isz = jnp.dtype(compute_dtype).itemsize
    y_dtype = jnp.bfloat16           # pre-BN intermediate round-trips HBM in bf16
    tm, n_m, m_pad, tm2, n_m2 = _pick_tiles(m_real, k9, co4, in_isz, 2, budget)

    w9 = _stacked_weights(weight).astype(compute_dtype)          # (4*Cout, 9*Cin)
    patches = _patches9(x, compute_dtype)                        # (9*Cin, M)
    if m_pad != m_real:
        # Explicit zero columns -> y == 0 there -> no effect on the BN partial sums.
        patches = jnp.pad(patches, ((0, 0), (0, m_pad - m_real)))

    def spec(shape, imap, bufs=None):
        if bufs is None:
            return pl.BlockSpec(shape, imap)
        return pl.BlockSpec(shape, imap, pipeline_mode=pl.Buffered(bufs))

    mm_flops = 2 * co4 * k9 * m_pad
    mm_bytes = (co4 * k9 * in_isz + k9 * m_pad * in_isz
                + co4 * m_pad * 2 + 2 * n_m * co4 * 4)

    # ---- Pass 1: stacked-phase MXU matmul with fused BN-stat epilogue ---------------
    y, psum, psq = pl.pallas_call(
        _matmul_stats_kernel,
        out_shape=(
            jax.ShapeDtypeStruct((co4, m_pad), y_dtype),
            jax.ShapeDtypeStruct((n_m, co4, 1), jnp.float32),
            jax.ShapeDtypeStruct((n_m, co4, 1), jnp.float32),
        ),
        grid_spec=pltpu.PrefetchScalarGridSpec(
            num_scalar_prefetch=0,
            grid=(n_m,),
            in_specs=[
                spec((co4, k9), lambda m: (0, 0)),
                spec((k9, tm), lambda m: (0, m), bufs=3 if n_m >= 3 else None),
            ],
            out_specs=(
                spec((co4, tm), lambda m: (0, m)),
                spec((1, co4, 1), lambda m: (m, 0, 0)),
                spec((1, co4, 1), lambda m: (m, 0, 0)),
            ),
        ),
        compiler_params=pltpu.CompilerParams(
            dimension_semantics=("parallel",),
            vmem_limit_bytes=vmem_limit,
        ),
        cost_estimate=pl.CostEstimate(
            flops=int(mm_flops), transcendentals=0, bytes_accessed=int(mm_bytes)),
    )(w9, patches)

    # ---- tiny XLA glue: per-tile partials -> per-channel scale / shift (f32) --------
    count = jnp.float32(4 * m_real)                  # = N * (2H) * (2W) per channel
    ch_sum = jnp.sum(psum.reshape(n_m, 4, c_out), axis=(0, 1))
    ch_sq = jnp.sum(psq.reshape(n_m, 4, c_out), axis=(0, 1))
    mean = ch_sum / count
    var = jnp.maximum(ch_sq / count - mean * mean, 0.0)   # biased (train-mode) variance
    inv_std = lax.rsqrt(var + eps)
    scale_c = gamma.astype(jnp.float32) * inv_std
    shift_c = beta.astype(jnp.float32) - mean * scale_c
    scale = jnp.tile(scale_c, 4).reshape(co4, 1)          # row p*Cout+c -> channel c
    shift = jnp.tile(shift_c, 4).reshape(co4, 1)

    # ---- Pass 2: wide-tile streaming normalize + ReLU -------------------------------
    # (input_output_aliases would drop the extra HBM buffer, but y is bf16 while the
    #  final output is f32, so the buffers cannot alias.)
    bn_bytes = co4 * m_pad * (2 + 4) + 2 * co4 * 4
    out_flat = pl.pallas_call(
        _bn_relu_kernel,
        out_shape=jax.ShapeDtypeStruct((co4, m_pad), jnp.float32),
        grid_spec=pltpu.PrefetchScalarGridSpec(
            num_scalar_prefetch=0,
            grid=(n_m2,),
            in_specs=[
                spec((co4, tm2), lambda m: (0, m), bufs=3 if n_m2 >= 3 else None),
                spec((co4, 1), lambda m: (0, 0)),
                spec((co4, 1), lambda m: (0, 0)),
            ],
            out_specs=spec((co4, tm2), lambda m: (0, m)),
        ),
        compiler_params=pltpu.CompilerParams(
            dimension_semantics=("parallel",),
            vmem_limit_bytes=vmem_limit,
        ),
        cost_estimate=pl.CostEstimate(
            flops=int(3 * co4 * m_pad), transcendentals=0, bytes_accessed=int(bn_bytes)),
    )(y, scale, shift)

    # (4 = py*2+px phase-major rows, Cout, N*H*W) -> NCHW, interleaving the 2x2 phases.
    out = out_flat[:, :m_real].reshape(2, 2, c_out, n, h, w)
    out = jnp.transpose(out, (3, 2, 4, 0, 5, 1)).reshape(n, c_out, 2 * h, 2 * w)
    # TODO(synk): a channels-last consumer could take the (4*Cout, M) slab (or NHWC)
    # directly and skip this final XLA de-interleave pass.
    return out


# ------------------------------- reference ----------------------------------


def _reference(x, weight, gamma, beta, *, stride=2, padding=1, eps=1e-5):
    c_in, c_out, k, _ = weight.shape
    # conv_transpose == lhs-dilated conv with flipped, transposed kernel
    w_t = jnp.transpose(weight[:, :, ::-1, ::-1], (1, 0, 2, 3))  # (Cout, Cin, k, k)
    pad = k - 1 - padding
    y = lax.conv_general_dilated(
        x, w_t,
        window_strides=(1, 1),
        padding=[(pad, pad), (pad, pad)],
        lhs_dilation=(stride, stride),
        dimension_numbers=("NCHW", "OIHW", "NCHW"),
    )
    mean = jnp.mean(y, axis=(0, 2, 3), keepdims=True)
    var = jnp.mean((y - mean) ** 2, axis=(0, 2, 3), keepdims=True)
    y_hat = (y - mean) * lax.rsqrt(var + eps)
    out = y_hat * gamma.reshape(1, -1, 1, 1) + beta.reshape(1, -1, 1, 1)
    return jnp.maximum(out, 0.0)


# --------------------------------- main --------------------------------------


if __name__ == "__main__":
    key = jax.random.PRNGKey(0)
    k_x, k_w = jax.random.split(key)

    N, C_IN, C_OUT, H, W = 2, 4, 8, 16, 16
    KERNEL, STRIDE, PADDING = 4, 2, 1

    x = jax.random.normal(k_x, (N, C_IN, H, W), dtype=jnp.float32)
    # DCGAN-style deterministic init for ConvTranspose2d weight (Cin, Cout, k, k)
    weight = 0.02 * jax.random.normal(k_w, (C_IN, C_OUT, KERNEL, KERNEL), jnp.float32)
    gamma = jnp.ones((C_OUT,), jnp.float32)   # BatchNorm2d default weight
    beta = jnp.zeros((C_OUT,), jnp.float32)   # BatchNorm2d default bias

    out = conv_transpose2d_block(
        x, weight, gamma, beta, stride=STRIDE, padding=PADDING
    )
    out = jax.block_until_ready(out)

    ref = _reference(x, weight, gamma, beta, stride=STRIDE, padding=PADDING)
    assert out.shape == (N, C_OUT, 2 * H, 2 * W), out.shape
    err = float(jnp.max(jnp.abs(out - ref)))
    # bf16 matmul inputs + bf16 pre-BN intermediate (f32 accumulation / f32 stats):
    # normalized outputs are O(1), so a few e-2 max-abs is the expected bf16 noise floor.
    assert err < 6e-2, err

    print("KERNEL_OK")
</pallas_src>

<mosaic_0001>
module attributes {stable_mosaic.version = 11 : i64} {
  func.func @_matmul_stats_kernel(%arg0: i32, %arg1: memref<32x36xbf16, #tpu.memory_space<vmem>>, %arg2: memref<36x512xbf16, #tpu.memory_space<vmem>>, %arg3: memref<32x512xbf16, #tpu.memory_space<vmem>>, %arg4: memref<1x32x1xf32, #tpu.memory_space<vmem>>, %arg5: memref<1x32x1xf32, #tpu.memory_space<vmem>>) attributes {dimension_semantics = [#tpu.dimension_semantics<parallel>], iteration_bounds = array<i64: 1>, scalar_prefetch = 0 : i64, scratch_operands = 0 : i64, tpu.core_type = #tpu.core_type<tc>, window_params = [{pipeline_mode = #tpu.pipeline_mode<synchronous>, transform_indices = @transform_0, window_bounds = array<i64: 32, 36>}, {transform_indices = @transform_1, window_bounds = array<i64: 36, 512>}, {transform_indices = @transform_2, window_bounds = array<i64: 32, 512>}, {transform_indices = @transform_3, window_bounds = array<i64: 1, 32, 1>}, {transform_indices = @transform_4, window_bounds = array<i64: 1, 32, 1>}]} {
    %c0 = arith.constant 0 : index
    %c0_0 = arith.constant 0 : index
    %0 = vector.load %arg1[%c0, %c0_0] : memref<32x36xbf16, #tpu.memory_space<vmem>>, vector<32x36xbf16>
    %c0_1 = arith.constant 0 : index
    %c0_2 = arith.constant 0 : index
    %1 = vector.load %arg2[%c0_1, %c0_2] : memref<36x512xbf16, #tpu.memory_space<vmem>>, vector<36x512xbf16>
    %cst = arith.constant dense<0.000000e+00> : vector<32x512xf32>
    %2 = tpu.matmul %0, %1, %cst {dimension_numbers = #tpu.dot_dimension_numbers<[1], [0], [0], [1], [0, 0, 1, 1], [], []>} : vector<32x36xbf16>, vector<36x512xbf16>, vector<32x512xf32> -> vector<32x512xf32>
    %3 = arith.truncf %2 : vector<32x512xf32> to vector<32x512xbf16>
    %c0_3 = arith.constant 0 : index
    %c0_4 = arith.constant 0 : index
    %4 = vector.load %arg3[%c0_3, %c0_4] : memref<32x512xbf16, #tpu.memory_space<vmem>>, vector<32x512xbf16>
    tpu.vector_store %arg3[%c0_3, %c0_4], %3 {strides = array<i32>} : memref<32x512xbf16, #tpu.memory_space<vmem>>, vector<32x512xbf16>,
    %cst_5 = arith.constant dense<0.000000e+00> : vector<32xf32>
    %5 = vector.multi_reduction <add>, %2, %cst_5 [1] : vector<32x512xf32> to vector<32xf32>
    %6 = vector.shape_cast %5 : vector<32xf32> to vector<32x1xf32>
    %c0_6 = arith.constant 0 : index
    %c0_7 = arith.constant 0 : index
    %c0_8 = arith.constant 0 : index
    %7 = vector.load %arg4[%c0_6, %c0_7, %c0_8] : memref<1x32x1xf32, #tpu.memory_space<vmem>>, vector<1x32x1xf32>
    %8 = vector.shape_cast %7 : vector<1x32x1xf32> to vector<32x1xf32>
    %9 = vector.shape_cast %6 : vector<32x1xf32> to vector<1x32x1xf32>
    tpu.vector_store %arg4[%c0_6, %c0_7, %c0_8], %9 {strides = array<i32>} : memref<1x32x1xf32, #tpu.memory_space<vmem>>, vector<1x32x1xf32>,
    %10 = arith.mulf %2, %2 : vector<32x512xf32>
    %cst_9 = arith.constant dense<0.000000e+00> : vector<32xf32>
    %11 = vector.multi_reduction <add>, %10, %cst_9 [1] : vector<32x512xf32> to vector<32xf32>
    %12 = vector.shape_cast %11 : vector<32xf32> to vector<32x1xf32>
    %c0_10 = arith.constant 0 : index
    %c0_11 = arith.constant 0 : index
    %c0_12 = arith.constant 0 : index
    %13 = vector.load %arg5[%c0_10, %c0_11, %c0_12] : memref<1x32x1xf32, #tpu.memory_space<vmem>>, vector<1x32x1xf32>
    %14 = vector.shape_cast %13 : vector<1x32x1xf32> to vector<32x1xf32>
    %15 = vector.shape_cast %12 : vector<32x1xf32> to vector<1x32x1xf32>
    tpu.vector_store %arg5[%c0_10, %c0_11, %c0_12], %15 {strides = array<i32>} : memref<1x32x1xf32, #tpu.memory_space<vmem>>, vector<1x32x1xf32>,
    return
  }
  func.func @transform_0(%arg0: i32) -> (i32, i32) {
    %c0_i32 = arith.constant 0 : i32
    %c0_i32_0 = arith.constant 0 : i32
    %c0_i32_1 = arith.constant 0 : i32
    return %c0_i32, %c0_i32_0 : i32, i32
  }
  func.func @transform_1(%arg0: i32) -> (i32, i32) {
    %c0_i32 = arith.constant 0 : i32
    %c0_i32_0 = arith.constant 0 : i32
    return %c0_i32, %arg0 : i32, i32
  }
  func.func @transform_2(%arg0: i32) -> (i32, i32) {
    %c0_i32 = arith.constant 0 : i32
    %c0_i32_0 = arith.constant 0 : i32
    return %c0_i32, %arg0 : i32, i32
  }
  func.func @transform_3(%arg0: i32) -> (i32, i32, i32) {
    %c0_i32 = arith.constant 0 : i32
    %c0_i32_0 = arith.constant 0 : i32
    %c0_i32_1 = arith.constant 0 : i32
    return %arg0, %c0_i32, %c0_i32_0 : i32, i32, i32
  }
  func.func @transform_4(%arg0: i32) -> (i32, i32, i32) {
    %c0_i32 = arith.constant 0 : i32
    %c0_i32_0 = arith.constant 0 : i32
    %c0_i32_1 = arith.constant 0 : i32
    return %arg0, %c0_i32, %c0_i32_0 : i32, i32, i32
  }
}

</mosaic_0001>

<llo_original>
// kernel: tpu_custom_call.1
$region0: #{tpu_custom_call.1}
  #allocation0 [shape = 'u32[]', space=smem, size = 0x4, offset = 0x4, fixed_abs, tag = 'smem constant byte address 0x4 - core index']
  #allocation1 [shape = 'u32[144,128]{1,0:T(1,128)}', space=vmem, size = 0x12000, scoped, tag = 'internal scratch']
  %s0 = inlined_call_operand.hbm [shape: bf16[32,36], index: 0, kind: input, shape index: {}]
  %s1 = inlined_call_operand.hbm [shape: bf16[36,512], index: 1, kind: input, shape index: {}]
  %s2 = inlined_call_operand.hbm [shape: bf16[32,512], index: 2, kind: output, shape index: {0}]
  %s3 = inlined_call_operand.vmem [shape: f32[1,32,1], index: 3, kind: output, shape index: {1}]
  %s4 = inlined_call_operand.vmem [shape: f32[1,32,1], index: 4, kind: output, shape index: {2}]
  %5 = xla_tuple %s2, %s3, %s4
  %s6 = sld [smem:[#allocation0]]
  $region42: #{tpu_custom_call.1} parent=0
    _
  %s8 = ssub.s32 1, %s6
  %s9 = scalar_select 0, %s8, %s6
  $region1: #{tpu_custom_call.1} parent=0
    #allocation2 [shape = 'u8[8192]{0}', space=vmem, size = 0x2000, scoped, tag = 'input window, operand 0, single buffered']
    #allocation3 [shape = 's32[1]{0}', space=sflag, size = 0x4, scoped, tag = 'scoped memory for tpu_custom_call.1']
    #allocation4 [shape = 's32[1]{0}', space=sflag, size = 0x4, scoped, tag = 'scoped memory for tpu_custom_call.1']
    #allocation5 [shape = 'u8[40960]{0}', space=vmem, size = 0xa000, scoped, tag = 'input window, operand 1, single buffered']
    #allocation6 [shape = 's32[1]{0}', space=sflag, size = 0x4, scoped, tag = 'scoped memory for tpu_custom_call.1']
    #allocation7 [shape = 'u8[32768]{0}', space=vmem, size = 0x8000, scoped, tag = 'output window, operand 0, single buffered']
    %10 = vsyncpa [#allocation3], 0
    %11 = vsyncpa [#allocation6], 0
    %12 = vsyncpa [#allocation4], 0
    // Predicated region
    $region2: #{tpu_custom_call.1} parent=1 // pred_check
      _
    $region3: #{tpu_custom_call.1} parent=1 // pred_check_branch
      %14 = sbr.rel (0) target = $region5
    $region4: #{tpu_custom_call.1} parent=1 // pred_region
      %s16 = ssub.s32 256, 256
      %17 = vsyncadd [#allocation3], %s16
      %s18 = sshll.u32 [#allocation2], 4
      %s19 = int_to_ptr.vmem [resolvable:$true] %s18
      %24 = dma.hbm_to_vmem [thread:$0]  %s0, 256, %s19, [#allocation3], 64, 64, 4
    $region5: #{tpu_custom_call.1} parent=1 // pred_fallthru
      _
    // Predicated region
    $region6: #{tpu_custom_call.1} parent=1 // pred_check
      _
    $region7: #{tpu_custom_call.1} parent=1 // pred_check_branch
      %26 = sbr.rel (0) target = $region9
    $region8: #{tpu_custom_call.1} parent=1 // pred_region
      %s28 = ssub.s32 1280, 1280
      %29 = vsyncadd [#allocation6], %s28
      %s30 = sshll.u32 [#allocation5], 4
      %s31 = int_to_ptr.vmem [resolvable:$true] %s30
      %36 = dma.hbm_to_vmem [thread:$0]  %s1, 1280, %s31, [#allocation6], 256, 256, 16
    $region9: #{tpu_custom_call.1} parent=1 // pred_fallthru
      _
    // Predicated region
    $region10: #{tpu_custom_call.1} parent=1 // pred_check
      _
    $region11: #{tpu_custom_call.1} parent=1 // pred_check_branch
      %38 = sbr.rel (0) target = $region13
    $region12: #{tpu_custom_call.1} parent=1 // pred_region
      %39 = dma.done [#allocation3], 256
    $region13: #{tpu_custom_call.1} parent=1 // pred_fallthru
      _
    // Predicated region
    $region14: #{tpu_custom_call.1} parent=1 // pred_check
      _
    $region15: #{tpu_custom_call.1} parent=1 // pred_check_branch
      %41 = sbr.rel (0) target = $region17
    $region16: #{tpu_custom_call.1} parent=1 // pred_region
      %42 = dma.done [#allocation6], 1280
    $region17: #{tpu_custom_call.1} parent=1 // pred_fallthru
      _
    %v44 = vld [vmem:[#allocation2] sm:$0xf]
    %v45 = vld [vmem:[#allocation2 + $0x4] sm:$0xf]
    %v46 = vld [vmem:[#allocation2 + $0x8] sm:$0xf]
    %v47 = vld [vmem:[#allocation2 + $0xc] sm:$0xf]
    %v48 = vld [vmem:[#allocation5] sm:$0xff]
    %v49 = vld [vmem:[#allocation5 + $0x8] sm:$0xff]
    %v50 = vld [vmem:[#allocation5 + $0x10] sm:$0xff]
    %v51 = vld [vmem:[#allocation5 + $0x18] sm:$0xff]
    %v52 = vld [vmem:[#allocation5 + $0x20] sm:$0xff]
    %v53 = vld [vmem:[#allocation5 + $0x28] sm:$0xff]
    %v54 = vld [vmem:[#allocation5 + $0x30] sm:$0xff]
    %v55 = vld [vmem:[#allocation5 + $0x38] sm:$0xff]
    %v56 = vld [vmem:[#allocation5 + $0x40] sm:$0x33]
    %v57 = vld [vmem:[#allocation5 + $0x48] sm:$0x33]
    %v62 = vunpack.c.l.b16 %v44
    %v63 = vunpack.c.l.b16 %v45
    %v64 = vunpack.c.l.b16 %v46
    %v65 = vunpack.c.l.b16 %v47
    %v66 = vpack.c.b16 %v63, %v62
    %v67 = vpack.c.b16 %v65, %v64
    %v78 = vunpack.c.l.b16 %v48
    %v79 = vunpack.c.h.b16 %v48
    %v80 = vunpack.c.l.b16 %v49
    %v81 = vunpack.c.h.b16 %v49
    %v82 = vunpack.c.l.b16 %v50
    %v83 = vunpack.c.h.b16 %v50
    %v84 = vunpack.c.l.b16 %v51
    %v85 = vunpack.c.h.b16 %v51
    %v86 = vunpack.c.l.b16 %v52
    %v87 = vunpack.c.h.b16 %v52
    %v88 = vunpack.c.l.b16 %v53
    %v89 = vunpack.c.h.b16 %v53
    %v90 = vunpack.c.l.b16 %v54
    %v91 = vunpack.c.h.b16 %v54
    %v92 = vunpack.c.l.b16 %v55
    %v93 = vunpack.c.h.b16 %v55
    %v94 = vunpack.c.l.b16 %v56
    %v95 = vunpack.c.h.b16 %v56
    %v96 = vunpack.c.l.b16 %v57
    %v97 = vunpack.c.h.b16 %v57
    %v98 = vpack.c.b16 %v82, %v78
    %v99 = vpack.c.b16 %v83, %v79
    %v100 = vpack.c.b16 %v84, %v80
    %v101 = vpack.c.b16 %v85, %v81
    %v102 = vpack.c.b16 %v90, %v86
    %v103 = vpack.c.b16 %v91, %v87
    %v104 = vpack.c.b16 %v92, %v88
    %v105 = vpack.c.b16 %v93, %v89
    %v106 = vpack.c.b16 %v94, %v94
    %v107 = vpack.c.b16 %v95, %v95
    %v108 = vpack.c.b16 %v96, %v96
    %v109 = vpack.c.b16 %v97, %v97
    %vm118 = vcmask 293888
    %v120 = vsel %vm118, %v66, 0
    %v123 = vsel %vm118, %v67, 0
    %vm125 = vcmask 1041408
    %v127 = vsel %vm125, %v106, 0
    %v130 = vsel %vm125, %v107, 0
    %v133 = vsel %vm125, %v108, 0
    %v136 = vsel %vm125, %v109, 0
    %138 = vmatprep.subr.bf16.mxu0 %v99
    %139 = vmatpush1.bf16.msra.mxu0 %v98
    %140 = vmatprep.subr.bf16.mxu0 %v103
    %141 = vmatpush1.bf16.msra.mxu0 %v102
    %142 = vmatprep.subr.bf16.mxu0 %v130
    %143 = vmatpush1.bf16.msra.mxu0 %v127
    %144 = vmatprep.subr.bf16.mxu0 0
    %145 = vmatpush1.bf16.msra.mxu0 0
    %146 = vmatprep.subr.bf16.mxu0 0
    %147 = vmatpush1.bf16.msra.mxu0 0
    %148 = vmatprep.subr.bf16.mxu0 0
    %149 = vmatpush1.bf16.msra.mxu0 0
    %150 = vmatprep.subr.bf16.mxu0 0
    %151 = vmatpush1.bf16.msra.mxu0 0
    %152 = vmatprep.subr.bf16.mxu0 0
    %153 = vmatpush1.bf16.msra.mxu0 0
    %154 = vmatprep.subr.bf16.mxu0 0
    %155 = vmatpush1.bf16.msra.mxu0 0
    %156 = vmatprep.subr.bf16.mxu0 0
    %157 = vmatpush1.bf16.msra.mxu0 0
    %158 = vmatprep.subr.bf16.mxu0 0
    %159 = vmatpush1.bf16.msra.mxu0 0
    %160 = vmatprep.subr.bf16.mxu0 0
    %161 = vmatpush1.bf16.msra.mxu0 0
    %162 = vmatprep.subr.bf16.mxu0 0
    %163 = vmatpush1.bf16.msra.mxu0 0
    %164 = vmatprep.subr.bf16.mxu0 0
    %165 = vmatpush1.bf16.msra.mxu0 0
    %166 = vmatprep.subr.bf16.mxu0 0
    %167 = vmatpush1.bf16.msra.mxu0 0
    %168 = vmatprep.subr.bf16.mxu0 0
    %169 = vmatpush1.bf16.msra.mxu0 0
    %170 = vmatprep.mubr.bf16.mxu0 0
    %171 = vmatmul.mubr.bf16.gmra.mrb[0].mxu0 %v120
    %v172 = vpop.f32.mrb[0].mxu0
    %v173 = vadd.f32 0.0, %v172
    %v174 = vpop.f32.mrb[0].mxu0
    %v175 = vadd.f32 0.0, %v174
    %v176 = vpop.f32.mrb[0].mxu0
    %v177 = vadd.f32 0.0, %v176
    %v178 = vpop.f32.mrb[0].mxu0
    %v179 = vadd.f32 0.0, %v178
    %180 = vmatprep.mubr.bf16.mxu0 0
    %181 = vmatmul.mubr.bf16.gmra.mrb[0].mxu0 %v123
    %v182 = vpop.f32.mrb[0].mxu0
    %v183 = vadd.f32 0.0, %v182
    %v184 = vpop.f32.mrb[0].mxu0
    %v185 = vadd.f32 0.0, %v184
    %v186 = vpop.f32.mrb[0].mxu0
    %v187 = vadd.f32 0.0, %v186
    %v188 = vpop.f32.mrb[0].mxu0
    %v189 = vadd.f32 0.0, %v188
    %190 = vdwg.mxu0
    %191 = vmatprep.subr.bf16.mxu0 %v101
    %192 = vmatpush1.bf16.msra.mxu0 %v100
    %193 = vmatprep.subr.bf16.mxu0 %v105
    %194 = vmatpush1.bf16.msra.mxu0 %v104
    %195 = vmatprep.subr.bf16.mxu0 %v136
    %196 = vmatpush1.bf16.msra.mxu0 %v133
    %197 = vmatprep.subr.bf16.mxu0 0
    %198 = vmatpush1.bf16.msra.mxu0 0
    %199 = vmatprep.subr.bf16.mxu0 0
    %200 = vmatpush1.bf16.msra.mxu0 0
    %201 = vmatprep.subr.bf16.mxu0 0
    %202 = vmatpush1.bf16.msra.mxu0 0
    %203 = vmatprep.subr.bf16.mxu0 0
    %204 = vmatpush1.bf16.msra.mxu0 0
    %205 = vmatprep.subr.bf16.mxu0 0
    %206 = vmatpush1.bf16.msra.mxu0 0
    %207 = vmatprep.subr.bf16.mxu0 0
    %208 = vmatpush1.bf16.msra.mxu0 0
    %209 = vmatprep.subr.bf16.mxu0 0
    %210 = vmatpush1.bf16.msra.mxu0 0
    %211 = vmatprep.subr.bf16.mxu0 0
    %212 = vmatpush1.bf16.msra.mxu0 0
    %213 = vmatprep.subr.bf16.mxu0 0
    %214 = vmatpush1.bf16.msra.mxu0 0
    %215 = vmatprep.subr.bf16.mxu0 0
    %216 = vmatpush1.bf16.msra.mxu0 0
    %217 = vmatprep.subr.bf16.mxu0 0
    %218 = vmatpush1.bf16.msra.mxu0 0
    %219 = vmatprep.subr.bf16.mxu0 0
    %220 = vmatpush1.bf16.msra.mxu0 0
    %221 = vmatprep.subr.bf16.mxu0 0
    %222 = vmatpush1.bf16.msra.mxu0 0
    %223 = vmatprep.mubr.bf16.mxu0 0
    %224 = vmatmul.mubr.bf16.gmra.mrb[0].mxu0 %v120
    %v225 = vpop.f32.mrb[0].mxu0
    %v226 = vadd.f32 0.0, %v225
    %v227 = vpop.f32.mrb[0].mxu0
    %v228 = vadd.f32 0.0, %v227
    %v229 = vpop.f32.mrb[0].mxu0
    %v230 = vadd.f32 0.0, %v229
    %v231 = vpop.f32.mrb[0].mxu0
    %v232 = vadd.f32 0.0, %v231
    %233 = vmatprep.mubr.bf16.mxu0 0
    %234 = vmatmul.mubr.bf16.gmra.mrb[0].mxu0 %v123
    %v235 = vpop.f32.mrb[0].mxu0
    %v236 = vadd.f32 0.0, %v235
    %v237 = vpop.f32.mrb[0].mxu0
    %v238 = vadd.f32 0.0, %v237
    %v239 = vpop.f32.mrb[0].mxu0
    %v240 = vadd.f32 0.0, %v239
    %v241 = vpop.f32.mrb[0].mxu0
    %v242 = vadd.f32 0.0, %v241
    %243 = vdwg.mxu0
    %v244 = vpack.c.bf16 %v177, %v173
    %v245 = vpack.c.bf16 %v179, %v175
    %v246 = vpack.c.bf16 %v230, %v226
    %v247 = vpack.c.bf16 %v232, %v228
    %v248 = vpack.c.bf16 %v187, %v183
    %v249 = vpack.c.bf16 %v189, %v185
    %v250 = vpack.c.bf16 %v240, %v236
    %v251 = vpack.c.bf16 %v242, %v238
    %v260 = vunpack.c.l.b16 %v244
    %v261 = vunpack.c.l.b16 %v245
    %v262 = vunpack.c.l.b16 %v246
    %v263 = vunpack.c.l.b16 %v247
    %v264 = vunpack.c.h.b16 %v244
    %v265 = vunpack.c.h.b16 %v245
    %v266 = vunpack.c.h.b16 %v246
    %v267 = vunpack.c.h.b16 %v247
    %v268 = vunpack.c.l.b16 %v248
    %v269 = vunpack.c.l.b16 %v249
    %v270 = vunpack.c.l.b16 %v250
    %v271 = vunpack.c.l.b16 %v251
    %v272 = vunpack.c.h.b16 %v248
    %v273 = vunpack.c.h.b16 %v249
    %v274 = vunpack.c.h.b16 %v250
    %v275 = vunpack.c.h.b16 %v251
    %v276 = vpack.c.b16 %v261, %v260
    %v277 = vpack.c.b16 %v263, %v262
    %v278 = vpack.c.b16 %v265, %v264
    %v279 = vpack.c.b16 %v267, %v266
    %v280 = vpack.c.b16 %v269, %v268
    %v281 = vpack.c.b16 %v271, %v270
    %v282 = vpack.c.b16 %v273, %v272
    %v283 = vpack.c.b16 %v275, %v274
    %292 = vst [vmem:[#allocation7] sm:$0xff] %v276
    %293 = vst [vmem:[#allocation7 + $0x8] sm:$0xff] %v277
    %294 = vst [vmem:[#allocation7 + $0x10] sm:$0xff] %v278
    %295 = vst [vmem:[#allocation7 + $0x18] sm:$0xff] %v279
    %296 = vst [vmem:[#allocation7 + $0x20] sm:$0xff] %v280
    %297 = vst [vmem:[#allocation7 + $0x28] sm:$0xff] %v281
    %298 = vst [vmem:[#allocation7 + $0x30] sm:$0xff] %v282
    %299 = vst [vmem:[#allocation7 + $0x38] sm:$0xff] %v283
    %v300 = vadd.f32 %v173, %v175
    %v301 = vadd.f32 %v300, %v226
    %v302 = vadd.f32 %v301, %v228
    %303 = vadd.xlane.f32.xlu0 %v302
    %v304 = vpop.xlane.xlu0 %303
    %v305 = vadd.f32 %v177, %v179
    %v306 = vadd.f32 %v305, %v230
    %v307 = vadd.f32 %v306, %v232
    %308 = vadd.xlane.f32.xlu0 %v307
    %v309 = vpop.xlane.xlu0 %308
    %v310 = vadd.f32 %v183, %v185
    %v311 = vadd.f32 %v310, %v236
    %v312 = vadd.f32 %v311, %v238
    %313 = vadd.xlane.f32.xlu0 %v312
    %v314 = vpop.xlane.xlu0 %313
    %v315 = vadd.f32 %v187, %v189
    %v316 = vadd.f32 %v315, %v240
    %v317 = vadd.f32 %v316, %v242
    %318 = vadd.xlane.f32.xlu0 %v317
    %v319 = vpop.xlane.xlu0 %318
    %vm320 = vcmask 7168
    %321 = vst.msk [vmem:[%s3] sm:$0xff] %vm320, %v304
    %322 = vst.msk [vmem:[%s3 + $0x8] sm:$0xff] %vm320, %v309
    %323 = vst.msk [vmem:[%s3 + $0x10] sm:$0xff] %vm320, %v314
    %324 = vst.msk [vmem:[%s3 + $0x18] sm:$0xff] %vm320, %v319
    %v325 = vmul.f32 %v173, %v173
    %v326 = vmul.f32 %v175, %v175
    %v327 = vmul.f32 %v226, %v226
    %v328 = vmul.f32 %v228, %v228
    %v329 = vmul.f32 %v177, %v177
    %v330 = vmul.f32 %v179, %v179
    %v331 = vmul.f32 %v230, %v230
    %v332 = vmul.f32 %v232, %v232
    %v333 = vmul.f32 %v183, %v183
    %v334 = vmul.f32 %v185, %v185
    %v335 = vmul.f32 %v236, %v236
    %v336 = vmul.f32 %v238, %v238
    %v337 = vmul.f32 %v187, %v187
    %v338 = vmul.f32 %v189, %v189
    %v339 = vmul.f32 %v240, %v240
    %v340 = vmul.f32 %v242, %v242
    %v341 = vadd.f32 %v325, %v326
    %v342 = vadd.f32 %v341, %v327
    %v343 = vadd.f32 %v342, %v328
    %344 = vadd.xlane.f32.xlu0 %v343
    %v345 = vpop.xlane.xlu0 %344
    %v346 = vadd.f32 %v329, %v330
    %v347 = vadd.f32 %v346, %v331
    %v348 = vadd.f32 %v347, %v332
    %349 = vadd.xlane.f32.xlu0 %v348
    %v350 = vpop.xlane.xlu0 %349
    %v351 = vadd.f32 %v333, %v334
    %v352 = vadd.f32 %v351, %v335
    %v353 = vadd.f32 %v352, %v336
    %354 = vadd.xlane.f32.xlu0 %v353
    %v355 = vpop.xlane.xlu0 %354
    %v356 = vadd.f32 %v337, %v338
    %v357 = vadd.f32 %v356, %v339
    %v358 = vadd.f32 %v357, %v340
    %359 = vadd.xlane.f32.xlu0 %v358
    %v360 = vpop.xlane.xlu0 %359
    %361 = vst.msk [vmem:[%s4] sm:$0xff] %vm320, %v345
    %362 = vst.msk [vmem:[%s4 + $0x8] sm:$0xff] %vm320, %v350
    %363 = vst.msk [vmem:[%s4 + $0x10] sm:$0xff] %vm320, %v355
    %364 = vst.msk [vmem:[%s4 + $0x18] sm:$0xff] %vm320, %v360
    // Predicated region
    $region18: #{tpu_custom_call.1} parent=1 // pred_check
      _
    $region19: #{tpu_custom_call.1} parent=1 // pred_check_branch
      %366 = sbr.rel (0) target = $region21
    $region20: #{tpu_custom_call.1} parent=1 // pred_region
      %s368 = ssub.s32 1024, 1024
      %369 = vsyncadd [#allocation4], %s368
      %s370 = sshll.u32 [#allocation7], 4
      %s371 = int_to_ptr.vmem [resolvable:$true] %s370
      %376 = dma.vmem_to_hbm [thread:$0]  %s371, 1024, %s2, [#allocation4], 256, 256, 16
    $region21: #{tpu_custom_call.1} parent=1 // pred_fallthru
      _
    // Predicated region
    $region22: #{tpu_custom_call.1} parent=1 // pred_check
      _
    $region23: #{tpu_custom_call.1} parent=1 // pred_check_branch
      %378 = sbr.rel (0) target = $region25
    $region24: #{tpu_custom_call.1} parent=1 // pred_region
      _
    $region25: #{tpu_custom_call.1} parent=1 // pred_fallthru
      _
    // Predicated region
    $region26: #{tpu_custom_call.1} parent=1 // pred_check
      _
    $region27: #{tpu_custom_call.1} parent=1 // pred_check_branch
      %380 = sbr.rel (0) target = $region29
    $region28: #{tpu_custom_call.1} parent=1 // pred_region
      _
    $region29: #{tpu_custom_call.1} parent=1 // pred_fallthru
      _
    // Predicated region
    $region30: #{tpu_custom_call.1} parent=1 // pred_check
      _
    $region31: #{tpu_custom_call.1} parent=1 // pred_check_branch
      %382 = sbr.rel (0) target = $region33
    $region32: #{tpu_custom_call.1} parent=1 // pred_region
      %383 = dma.done [#allocation4], 1024
    $region33: #{tpu_custom_call.1} parent=1 // pred_fallthru
      _
    // Predicated region
    $region34: #{tpu_custom_call.1} parent=1 // pred_check
      _
    $region35: #{tpu_custom_call.1} parent=1 // pred_check_branch
      %385 = sbr.rel (0) target = $region37
    $region36: #{tpu_custom_call.1} parent=1 // pred_region
      _
    $region37: #{tpu_custom_call.1} parent=1 // pred_fallthru
      _
    // Predicated region
    $region38: #{tpu_custom_call.1} parent=1 // pred_check
      _
    $region39: #{tpu_custom_call.1} parent=1 // pred_check_branch
      %387 = sbr.rel (0) target = $region41
    $region40: #{tpu_custom_call.1} parent=1 // pred_region
      _
    $region41: #{tpu_custom_call.1} parent=1 // pred_fallthru
      _
    %388 = vsyncpa [#allocation3], 1
    %389 = vsyncpa [#allocation6], 1
    %390 = vsyncpa [#allocation4], 1

</llo_original>
